<compile_context>
chip_gen: v6e
topology: v6e:2x2x1
jax: 0.10.0
libtpu: 0.0.40
codegen_flags: <defaults>
</compile_context>

<pallas_src>
import jax
import jax.numpy as jnp
from jax import lax
from jax.experimental import pallas as pl
from jax.experimental.pallas import tpu as pltpu


def _round_up(x, m):
    return (x + m - 1) // m * m


def _pick_tile(n_pad128, preferred):
    """Largest power-of-two tile >=128 that is <= preferred and <= n_pad128."""
    t = 128
    while t * 2 <= preferred and t * 2 <= n_pad128:
        t *= 2
    return t


# --------------------------------------------------------------------------
# Stage 1: one GCN layer  out = relu(A_tilde @ H @ W), tiled over output rows
# (parallel) and over the node reduction dim (arbitrary, f32 accumulator).
# --------------------------------------------------------------------------
def _gcn_layer_kernel(a_ref, h_ref, w_ref, out_ref, acc_ref):
    k = pl.program_id(1)

    @pl.when(k == 0)
    def _():
        acc_ref[...] = jnp.zeros_like(acc_ref)

    # Cheap association: (A_tile @ (H_tile @ W)); f32 accumulation on the MXU.
    hw = jnp.dot(h_ref[...], w_ref[...], preferred_element_type=jnp.float32)
    acc_ref[...] += jnp.dot(a_ref[...], hw.astype(a_ref.dtype),
                            preferred_element_type=jnp.float32)

    @pl.when(k == pl.num_programs(1) - 1)
    def _():
        # relu epilogue in f32, then cast to the storage dtype.
        out_ref[...] = jnp.maximum(acc_ref[...], 0.0).astype(out_ref.dtype)


def _gcn_layer(a, h, w, *, tile_m, tile_k, out_dtype, vmem_limit_bytes):
    n = a.shape[0]
    f = h.shape[1]
    d = w.shape[1]
    grid = (n // tile_m, n // tile_k)
    return pl.pallas_call(
        _gcn_layer_kernel,
        out_shape=jax.ShapeDtypeStruct((n, d), out_dtype),
        grid_spec=pltpu.PrefetchScalarGridSpec(
            num_scalar_prefetch=0,
            grid=grid,
            in_specs=[
                pl.BlockSpec((tile_m, tile_k), lambda i, k: (i, k)),   # A_tilde tile
                pl.BlockSpec((tile_k, f), lambda i, k: (k, 0)),        # H row-tile
                pl.BlockSpec((f, d), lambda i, k: (0, 0)),             # W (full)
            ],
            out_specs=pl.BlockSpec((tile_m, d), lambda i, k: (i, 0)),
            scratch_shapes=[pltpu.VMEM((tile_m, d), jnp.float32)],
        ),
        compiler_params=pltpu.CompilerParams(
            dimension_semantics=("parallel", "arbitrary"),
            vmem_limit_bytes=vmem_limit_bytes,
        ),
    )(a, h, w)


# --------------------------------------------------------------------------
# Stage 2: tiled inner-product decoder  probs = sigmoid(Z2 @ Z2^T)
# --------------------------------------------------------------------------
def _decoder_kernel(zi_ref, zj_ref, probs_ref):
    # Z_i @ Z_j^T expressed directly as a contraction (no explicit transpose).
    logits = lax.dot_general(
        zi_ref[...], zj_ref[...],
        dimension_numbers=(((1,), (1,)), ((), ())),
        preferred_element_type=jnp.float32,
    )
    probs_ref[...] = jax.nn.sigmoid(logits).astype(probs_ref.dtype)


def _inner_product_decoder(z, *, tile_m, tile_n, out_dtype, vmem_limit_bytes):
    n, d = z.shape
    grid = (n // tile_m, n // tile_n)
    return pl.pallas_call(
        _decoder_kernel,
        out_shape=jax.ShapeDtypeStruct((n, n), out_dtype),
        grid_spec=pltpu.PrefetchScalarGridSpec(
            num_scalar_prefetch=0,
            grid=grid,
            in_specs=[
                pl.BlockSpec((tile_m, d), lambda i, j: (i, 0)),   # Z2 row-tile i
                pl.BlockSpec((tile_n, d), lambda i, j: (j, 0)),   # Z2 row-tile j
            ],
            out_specs=pl.BlockSpec((tile_m, tile_n), lambda i, j: (i, j)),
        ),
        compiler_params=pltpu.CompilerParams(
            # Both output-tile axes are independent -> shard across TCs on v7x.
            dimension_semantics=("parallel", "parallel"),
            vmem_limit_bytes=vmem_limit_bytes,
        ),
    )(z, z)


# --------------------------------------------------------------------------
# Full forward
# --------------------------------------------------------------------------
def two_layer_gcn_edge(A_tilde, X, W1, W2, *,
                       compute_dtype=jnp.bfloat16,
                       out_dtype=jnp.float32,
                       node_tile_m=256, node_tile_n=256, node_tile_k=512,
                       vmem_limit_bytes=48 * 1024 * 1024):
    N, F = X.shape
    H1 = W1.shape[1]
    H2 = W2.shape[1]

    # Lane-dense padding: node dim to a multiple of the (power-of-two) tiles,
    # feature/hidden dims to multiples of 128 so MXU K-dims and stores are full.
    n128 = _round_up(N, 128)
    tm = _pick_tile(n128, node_tile_m)
    tn = _pick_tile(n128, node_tile_n)
    tk = _pick_tile(n128, node_tile_k)
    N_pad = _round_up(N, max(tm, tn, tk))
    F_pad = _round_up(F, 128)
    H1_pad = _round_up(H1, 128)
    H2_pad = _round_up(H2, 128)

    def pad2(x, rows, cols):
        return jnp.pad(x, ((0, rows - x.shape[0]), (0, cols - x.shape[1])))

    a = pad2(A_tilde, N_pad, N_pad).astype(compute_dtype)
    x = pad2(X, N_pad, F_pad).astype(compute_dtype)
    w1 = pad2(W1, F_pad, H1_pad).astype(compute_dtype)
    w2 = pad2(W2, H1_pad, H2_pad).astype(compute_dtype)

    # dropout(p=0) is the identity (and the module is used in that config).
    z1 = _gcn_layer(a, x, w1, tile_m=tm, tile_k=tk,
                    out_dtype=compute_dtype, vmem_limit_bytes=vmem_limit_bytes)
    z2 = _gcn_layer(a, z1, w2, tile_m=tm, tile_k=tk,
                    out_dtype=compute_dtype, vmem_limit_bytes=vmem_limit_bytes)
    probs = _inner_product_decoder(z2, tile_m=tm, tile_n=tn,
                                   out_dtype=out_dtype,
                                   vmem_limit_bytes=vmem_limit_bytes)
    return probs[:N, :N]


# --------------------------------------------------------------------------
# Helpers for the self-test
# --------------------------------------------------------------------------
def make_a_tilde(A):
    """A_tilde = D^{-1/2} (I + A) D^{-1/2}; D = diag(rowsum(I + A))."""
    N = A.shape[0]
    A_hat = A + jnp.eye(N, dtype=A.dtype)
    deg = A_hat.sum(axis=1)
    d_inv_root = 1.0 / jnp.sqrt(deg)
    return (A_hat * d_inv_root[:, None]) * d_inv_root[None, :]


def reference_forward(A_tilde, X, W1, W2, compute_dtype):
    """Plain-JAX reference matching the kernel's dtype discipline."""
    cd = compute_dtype
    f32 = jnp.float32
    a = A_tilde.astype(cd)
    hw1 = jnp.dot(X.astype(cd), W1.astype(cd), preferred_element_type=f32)
    z1 = jax.nn.relu(jnp.dot(a, hw1.astype(cd), preferred_element_type=f32))
    hw2 = jnp.dot(z1.astype(cd), W2.astype(cd), preferred_element_type=f32)
    z2 = jax.nn.relu(jnp.dot(a, hw2.astype(cd), preferred_element_type=f32))
    z2c = z2.astype(cd)
    logits = lax.dot_general(z2c, z2c, (((1,), (1,)), ((), ())),
                             preferred_element_type=f32)
    return jax.nn.sigmoid(logits)


if __name__ == "__main__":
    # Small shapes consistent with the module's forward.
    num_nodes = 16
    num_features = 8
    hidden_dim1 = 32
    hidden_dim2 = 16

    key = jax.random.PRNGKey(0)
    k_adj, k_x, k_w1, k_w2 = jax.random.split(key, 4)

    # Deterministic symmetric 0/1 adjacency with zero diagonal.
    upper = (jax.random.uniform(k_adj, (num_nodes, num_nodes)) > 0.7).astype(jnp.float32)
    upper = jnp.triu(upper, k=1)
    A = upper + upper.T

    X = jax.random.normal(k_x, (num_nodes, num_features), dtype=jnp.float32)

    # Synthetic weights mirroring torch.normal(mean~1, std=1/hidden_dim) shapes.
    W1 = 1.0 + jax.random.normal(k_w1, (num_features, hidden_dim1), dtype=jnp.float32) / hidden_dim1
    W2 = 1.0 + jax.random.normal(k_w2, (hidden_dim1, hidden_dim2), dtype=jnp.float32) / hidden_dim2

    A_tilde = make_a_tilde(A)

    # f32 path: strict check against the plain-JAX reference.
    probs_f32 = two_layer_gcn_edge(A_tilde, X, W1, W2, compute_dtype=jnp.float32)
    probs_f32 = jax.block_until_ready(probs_f32)
    ref_f32 = reference_forward(A_tilde, X, W1, W2, jnp.float32)
    assert probs_f32.shape == (num_nodes, num_nodes)
    assert jnp.allclose(probs_f32, ref_f32, atol=1e-5, rtol=1e-5)

    # bf16 MXU path (f32 accumulation): loose check against a bf16-matched reference.
    probs_bf16 = two_layer_gcn_edge(A_tilde, X, W1, W2, compute_dtype=jnp.bfloat16)
    probs_bf16 = jax.block_until_ready(probs_bf16)
    ref_bf16 = reference_forward(A_tilde, X, W1, W2, jnp.bfloat16)
    assert probs_bf16.shape == (num_nodes, num_nodes)
    assert bool(jnp.all(jnp.isfinite(probs_bf16)))
    assert float(jnp.mean(jnp.abs(probs_bf16 - ref_bf16))) < 1e-2

    # TODO(synk): dropout with p > 0 (training mode) is not implemented; the
    # module's default p=0 (and eval mode) makes it the identity.
    print("KERNEL_OK")
</pallas_src>

<mosaic_0001>
module attributes {stable_mosaic.version = 11 : i64} {
  func.func @_gcn_layer_kernel(%arg0: i32, %arg1: i32, %arg2: memref<128x128xf32, #tpu.memory_space<vmem>>, %arg3: memref<128x128xf32, #tpu.memory_space<vmem>>, %arg4: memref<128x128xf32, #tpu.memory_space<vmem>>, %arg5: memref<128x128xf32, #tpu.memory_space<vmem>>, %arg6: memref<128x128xf32, #tpu.memory_space<vmem>>) attributes {dimension_semantics = [#tpu.dimension_semantics<parallel>, #tpu.dimension_semantics<arbitrary>], iteration_bounds = array<i64: 1, 1>, scalar_prefetch = 0 : i64, scratch_operands = 1 : i64, tpu.core_type = #tpu.core_type<tc>, window_params = [{transform_indices = @transform_0, window_bounds = array<i64: 128, 128>}, {transform_indices = @transform_1, window_bounds = array<i64: 128, 128>}, {pipeline_mode = #tpu.pipeline_mode<synchronous>, transform_indices = @transform_2, window_bounds = array<i64: 128, 128>}, {transform_indices = @transform_3, window_bounds = array<i64: 128, 128>}]} {
    %c0_i32 = arith.constant 0 : i32
    %0 = arith.cmpi eq, %arg1, %c0_i32 : i32
    %1 = arith.extui %0 : i1 to i32
    %c0_i32_0 = arith.constant 0 : i32
    %2 = arith.cmpi ne, %1, %c0_i32_0 : i32
    scf.if %2 {
      %cst_13 = arith.constant 0.000000e+00 : f32
      %14 = vector.broadcast %cst_13 : f32 to vector<128x128xf32>
      %c0_14 = arith.constant 0 : index
      %c0_15 = arith.constant 0 : index
      %15 = vector.load %arg6[%c0_14, %c0_15] : memref<128x128xf32, #tpu.memory_space<vmem>>, vector<128x128xf32>
      tpu.vector_store %arg6[%c0_14, %c0_15], %14 {strides = array<i32>} : memref<128x128xf32, #tpu.memory_space<vmem>>, vector<128x128xf32>,
    } else {
    }
    %c0 = arith.constant 0 : index
    %c0_1 = arith.constant 0 : index
    %3 = vector.load %arg3[%c0, %c0_1] : memref<128x128xf32, #tpu.memory_space<vmem>>, vector<128x128xf32>
    %c0_2 = arith.constant 0 : index
    %c0_3 = arith.constant 0 : index
    %4 = vector.load %arg4[%c0_2, %c0_3] : memref<128x128xf32, #tpu.memory_space<vmem>>, vector<128x128xf32>
    %cst = arith.constant dense<0.000000e+00> : vector<128x128xf32>
    %5 = tpu.matmul %3, %4, %cst {dimension_numbers = #tpu.dot_dimension_numbers<[1], [0], [0], [1], [0, 0, 1, 1], [], []>} : vector<128x128xf32>, vector<128x128xf32>, vector<128x128xf32> -> vector<128x128xf32>
    %c0_4 = arith.constant 0 : index
    %c0_5 = arith.constant 0 : index
    %6 = vector.load %arg6[%c0_4, %c0_5] : memref<128x128xf32, #tpu.memory_space<vmem>>, vector<128x128xf32>
    %c0_6 = arith.constant 0 : index
    %c0_7 = arith.constant 0 : index
    %7 = vector.load %arg2[%c0_6, %c0_7] : memref<128x128xf32, #tpu.memory_space<vmem>>, vector<128x128xf32>
    %cst_8 = arith.constant dense<0.000000e+00> : vector<128x128xf32>
    %8 = tpu.matmul %7, %5, %cst_8 {dimension_numbers = #tpu.dot_dimension_numbers<[1], [0], [0], [1], [0, 0, 1, 1], [], []>} : vector<128x128xf32>, vector<128x128xf32>, vector<128x128xf32> -> vector<128x128xf32>
    %9 = arith.addf %6, %8 : vector<128x128xf32>
    %c0_9 = arith.constant 0 : index
    %c0_10 = arith.constant 0 : index
    %10 = vector.load %arg6[%c0_9, %c0_10] : memref<128x128xf32, #tpu.memory_space<vmem>>, vector<128x128xf32>
    tpu.vector_store %arg6[%c0_9, %c0_10], %9 {strides = array<i32>} : memref<128x128xf32, #tpu.memory_space<vmem>>, vector<128x128xf32>,
    %c0_i32_11 = arith.constant 0 : i32
    %11 = arith.cmpi eq, %arg1, %c0_i32_11 : i32
    %12 = arith.extui %11 : i1 to i32
    %c0_i32_12 = arith.constant 0 : i32
    %13 = arith.cmpi ne, %12, %c0_i32_12 : i32
    scf.if %13 {
      %c0_13 = arith.constant 0 : index
      %c0_14 = arith.constant 0 : index
      %14 = vector.load %arg6[%c0_13, %c0_14] : memref<128x128xf32, #tpu.memory_space<vmem>>, vector<128x128xf32>
      %cst_15 = arith.constant 0.000000e+00 : f32
      %15 = vector.broadcast %cst_15 : f32 to vector<128x128xf32>
      %16 = arith.maximumf %14, %15 : vector<128x128xf32>
      %c0_16 = arith.constant 0 : index
      %c0_17 = arith.constant 0 : index
      %17 = vector.load %arg5[%c0_16, %c0_17] : memref<128x128xf32, #tpu.memory_space<vmem>>, vector<128x128xf32>
      tpu.vector_store %arg5[%c0_16, %c0_17], %16 {strides = array<i32>} : memref<128x128xf32, #tpu.memory_space<vmem>>, vector<128x128xf32>,
    } else {
    }
    return
  }
  func.func @transform_0(%arg0: i32, %arg1: i32) -> (i32, i32) {
    %c0_i32 = arith.constant 0 : i32
    return %arg0, %arg1 : i32, i32
  }
  func.func @transform_1(%arg0: i32, %arg1: i32) -> (i32, i32) {
    %c0_i32 = arith.constant 0 : i32
    %c0_i32_0 = arith.constant 0 : i32
    return %arg1, %c0_i32 : i32, i32
  }
  func.func @transform_2(%arg0: i32, %arg1: i32) -> (i32, i32) {
    %c0_i32 = arith.constant 0 : i32
    %c0_i32_0 = arith.constant 0 : i32
    %c0_i32_1 = arith.constant 0 : i32
    return %c0_i32, %c0_i32_0 : i32, i32
  }
  func.func @transform_3(%arg0: i32, %arg1: i32) -> (i32, i32) {
    %c0_i32 = arith.constant 0 : i32
    %c0_i32_0 = arith.constant 0 : i32
    return %arg0, %c0_i32 : i32, i32
  }
}

</mosaic_0001>

<llo_original>
// kernel: tpu_custom_call.1
$region0: #{tpu_custom_call.1}
  #allocation0 [shape = 'u32[]', space=smem, size = 0x4, offset = 0x4, fixed_abs, tag = 'smem constant byte address 0x4 - core index']
  #allocation1 [shape = 'u32[144,128]{1,0:T(1,128)}', space=vmem, size = 0x12000, scoped, tag = 'internal scratch']
  #allocation2 [shape = 'f32[128,128]{1,0:T(8,128)}', space=vmem, size = 0x10000, scoped, tag = 'scratch operand']
  %s0 = inlined_call_operand.hbm [shape: f32[128,128], index: 0, kind: input, shape index: {}]
  %s1 = inlined_call_operand.hbm [shape: f32[128,128], index: 1, kind: input, shape index: {}]
  %s2 = inlined_call_operand.hbm [shape: f32[128,128], index: 2, kind: input, shape index: {}]
  %s3 = inlined_call_operand.hbm [shape: f32[128,128], index: 3, kind: output, shape index: {}]
  %s4 = sld [smem:[#allocation0]]
  $region42: #{tpu_custom_call.1} parent=0
    _
  %s6 = ssub.s32 1, %s4
  %s7 = scalar_select 0, %s6, %s4
  $region1: #{tpu_custom_call.1} parent=0
    #allocation3 [shape = 'u8[65536]{0}', space=vmem, size = 0x10000, scoped, tag = 'input window, operand 0, single buffered']
    #allocation4 [shape = 's32[1]{0}', space=sflag, size = 0x4, scoped, tag = 'scoped memory for tpu_custom_call.1']
    #allocation5 [shape = 's32[1]{0}', space=sflag, size = 0x4, scoped, tag = 'scoped memory for tpu_custom_call.1']
    #allocation6 [shape = 'u8[65536]{0}', space=vmem, size = 0x10000, scoped, tag = 'input window, operand 1, single buffered']
    #allocation7 [shape = 's32[1]{0}', space=sflag, size = 0x4, scoped, tag = 'scoped memory for tpu_custom_call.1']
    #allocation8 [shape = 'u8[65536]{0}', space=vmem, size = 0x10000, scoped, tag = 'input window, operand 2, single buffered']
    #allocation9 [shape = 'u8[65536]{0}', space=vmem, size = 0x10000, scoped, tag = 'output window, operand 0, single buffered']
    %8 = vsyncpa [#allocation4], 0
    %9 = vsyncpa [#allocation7], 0
    %10 = vsyncpa [#allocation5], 0
    // Predicated region
    $region2: #{tpu_custom_call.1} parent=1 // pred_check
      _
    $region3: #{tpu_custom_call.1} parent=1 // pred_check_branch
      %12 = sbr.rel (0) target = $region5
    $region4: #{tpu_custom_call.1} parent=1 // pred_region
      %s14 = ssub.s32 2048, 2048
      %15 = vsyncadd [#allocation4], %s14
      %s16 = sshll.u32 [#allocation3], 4
      %s17 = int_to_ptr.vmem [resolvable:$true] %s16
      %22 = dma.hbm_to_vmem [thread:$0]  %s0, 2048, %s17, [#allocation4], 128, 128, 8
    $region5: #{tpu_custom_call.1} parent=1 // pred_fallthru
      _
    // Predicated region
    $region6: #{tpu_custom_call.1} parent=1 // pred_check
      _
    $region7: #{tpu_custom_call.1} parent=1 // pred_check_branch
      %24 = sbr.rel (0) target = $region9
    $region8: #{tpu_custom_call.1} parent=1 // pred_region
      %s26 = ssub.s32 2048, 2048
      %27 = vsyncadd [#allocation7], %s26
      %s28 = sshll.u32 [#allocation6], 4
      %s29 = int_to_ptr.vmem [resolvable:$true] %s28
      %34 = dma.hbm_to_vmem [thread:$0]  %s1, 2048, %s29, [#allocation7], 128, 128, 8
    $region9: #{tpu_custom_call.1} parent=1 // pred_fallthru
      _
    // Predicated region
    $region10: #{tpu_custom_call.1} parent=1 // pred_check
      _
    $region11: #{tpu_custom_call.1} parent=1 // pred_check_branch
      %36 = sbr.rel (0) target = $region13
    $region12: #{tpu_custom_call.1} parent=1 // pred_region
      %s38 = ssub.s32 2048, 2048
      %39 = vsyncadd [#allocation7], %s38
      %s40 = sshll.u32 [#allocation8], 4
      %s41 = int_to_ptr.vmem [resolvable:$true] %s40
      %46 = dma.hbm_to_vmem [thread:$0]  %s2, 2048, %s41, [#allocation7], 128, 128, 8
    $region13: #{tpu_custom_call.1} parent=1 // pred_fallthru
      _
    // Predicated region
    $region14: #{tpu_custom_call.1} parent=1 // pred_check
      _
    $region15: #{tpu_custom_call.1} parent=1 // pred_check_branch
      %48 = sbr.rel (0) target = $region17
    $region16: #{tpu_custom_call.1} parent=1 // pred_region
      %49 = dma.done [#allocation4], 2048
    $region17: #{tpu_custom_call.1} parent=1 // pred_fallthru
      _
    // Predicated region
    $region18: #{tpu_custom_call.1} parent=1 // pred_check
      _
    $region19: #{tpu_custom_call.1} parent=1 // pred_check_branch
      %51 = sbr.rel (0) target = $region21
    $region20: #{tpu_custom_call.1} parent=1 // pred_region
      %52 = dma.done [#allocation7], 2048
    $region21: #{tpu_custom_call.1} parent=1 // pred_fallthru
      _
    // Predicated region
    $region22: #{tpu_custom_call.1} parent=1 // pred_check
      _
    $region23: #{tpu_custom_call.1} parent=1 // pred_check_branch
      %54 = sbr.rel (0) target = $region25
    $region24: #{tpu_custom_call.1} parent=1 // pred_region
      %55 = dma.done [#allocation7], 2048
    $region25: #{tpu_custom_call.1} parent=1 // pred_fallthru
      _
    %p56 = scmp.eq.s32.totalorder 0, 0
    // Predicated region
    $region26: #{tpu_custom_call.1} parent=1 // pred_check
      %p57 = pneg %p56
    $region27: #{tpu_custom_call.1} parent=1 // pred_check_branch
      %59 = sbr.rel (%p57) target = $region29
    $region28: #{tpu_custom_call.1} parent=1 // pred_region
      %60 = vst [vmem:[#allocation2] sm:$0xff] 0.0
      %61 = vst [vmem:[#allocation2 + $0x8] sm:$0xff] 0.0
      %62 = vst [vmem:[#allocation2 + $0x10] sm:$0xff] 0.0
      %63 = vst [vmem:[#allocation2 + $0x18] sm:$0xff] 0.0
      %64 = vst [vmem:[#allocation2 + $0x20] sm:$0xff] 0.0
      %65 = vst [vmem:[#allocation2 + $0x28] sm:$0xff] 0.0
      %66 = vst [vmem:[#allocation2 + $0x30] sm:$0xff] 0.0
      %67 = vst [vmem:[#allocation2 + $0x38] sm:$0xff] 0.0
      %68 = vst [vmem:[#allocation2 + $0x40] sm:$0xff] 0.0
      %69 = vst [vmem:[#allocation2 + $0x48] sm:$0xff] 0.0
      %70 = vst [vmem:[#allocation2 + $0x50] sm:$0xff] 0.0
      %71 = vst [vmem:[#allocation2 + $0x58] sm:$0xff] 0.0
      %72 = vst [vmem:[#allocation2 + $0x60] sm:$0xff] 0.0
      %73 = vst [vmem:[#allocation2 + $0x68] sm:$0xff] 0.0
      %74 = vst [vmem:[#allocation2 + $0x70] sm:$0xff] 0.0
      %75 = vst [vmem:[#allocation2 + $0x78] sm:$0xff] 0.0
    $region29: #{tpu_custom_call.1} parent=1 // pred_fallthru
      _
    %v76 = vld [vmem:[#allocation6] sm:$0xff]
    %v77 = vld [vmem:[#allocation6 + $0x8] sm:$0xff]
    %v78 = vld [vmem:[#allocation6 + $0x10] sm:$0xff]
    %v79 = vld [vmem:[#allocation6 + $0x18] sm:$0xff]
    %v80 = vld [vmem:[#allocation6 + $0x20] sm:$0xff]
    %v81 = vld [vmem:[#allocation6 + $0x28] sm:$0xff]
    %v82 = vld [vmem:[#allocation6 + $0x30] sm:$0xff]
    %v83 = vld [vmem:[#allocation6 + $0x38] sm:$0xff]
    %v84 = vld [vmem:[#allocation6 + $0x40] sm:$0xff]
    %v85 = vld [vmem:[#allocation6 + $0x48] sm:$0xff]
    %v86 = vld [vmem:[#allocation6 + $0x50] sm:$0xff]
    %v87 = vld [vmem:[#allocation6 + $0x58] sm:$0xff]
    %v88 = vld [vmem:[#allocation6 + $0x60] sm:$0xff]
    %v89 = vld [vmem:[#allocation6 + $0x68] sm:$0xff]
    %v90 = vld [vmem:[#allocation6 + $0x70] sm:$0xff]
    %v91 = vld [vmem:[#allocation6 + $0x78] sm:$0xff]
    %v92 = vld [vmem:[#allocation8] sm:$0xff]
    %v93 = vld [vmem:[#allocation8 + $0x8] sm:$0xff]
    %v94 = vld [vmem:[#allocation8 + $0x10] sm:$0xff]
    %v95 = vld [vmem:[#allocation8 + $0x18] sm:$0xff]
    %v96 = vld [vmem:[#allocation8 + $0x20] sm:$0xff]
    %v97 = vld [vmem:[#allocation8 + $0x28] sm:$0xff]
    %v98 = vld [vmem:[#allocation8 + $0x30] sm:$0xff]
    %v99 = vld [vmem:[#allocation8 + $0x38] sm:$0xff]
    %v100 = vld [vmem:[#allocation8 + $0x40] sm:$0xff]
    %v101 = vld [vmem:[#allocation8 + $0x48] sm:$0xff]
    %v102 = vld [vmem:[#allocation8 + $0x50] sm:$0xff]
    %v103 = vld [vmem:[#allocation8 + $0x58] sm:$0xff]
    %v104 = vld [vmem:[#allocation8 + $0x60] sm:$0xff]
    %v105 = vld [vmem:[#allocation8 + $0x68] sm:$0xff]
    %v106 = vld [vmem:[#allocation8 + $0x70] sm:$0xff]
    %v107 = vld [vmem:[#allocation8 + $0x78] sm:$0xff]
    %108 = vmatprep.subr.mxu0 0.0
    %109 = vmatpush1.msra.mxu0 %v107
    %110 = vmatprep.subr.mxu0 0.0
    %111 = vmatpush1.msra.mxu0 %v106
    %112 = vmatprep.subr.mxu0 0.0
    %113 = vmatpush1.msra.mxu0 %v105
    %114 = vmatprep.subr.mxu0 0.0
    %115 = vmatpush1.msra.mxu0 %v104
    %116 = vmatprep.subr.mxu0 0.0
    %117 = vmatpush1.msra.mxu0 %v103
    %118 = vmatprep.subr.mxu0 0.0
    %119 = vmatpush1.msra.mxu0 %v102
    %120 = vmatprep.subr.mxu0 0.0
    %121 = vmatpush1.msra.mxu0 %v101
    %122 = vmatprep.subr.mxu0 0.0
    %123 = vmatpush1.msra.mxu0 %v100
    %124 = vmatprep.subr.mxu0 0.0
    %125 = vmatpush1.msra.mxu0 %v99
    %126 = vmatprep.subr.mxu0 0.0
    %127 = vmatpush1.msra.mxu0 %v98
    %128 = vmatprep.subr.mxu0 0.0
    %129 = vmatpush1.msra.mxu0 %v97
    %130 = vmatprep.subr.mxu0 0.0
    %131 = vmatpush1.msra.mxu0 %v96
    %132 = vmatprep.subr.mxu0 0.0
    %133 = vmatpush1.msra.mxu0 %v95
    %134 = vmatprep.subr.mxu0 0.0
    %135 = vmatpush1.msra.mxu0 %v94
    %136 = vmatprep.subr.mxu0 0.0
    %137 = vmatpush1.msra.mxu0 %v93
    %138 = vmatprep.subr.mxu0 0.0
    %139 = vmatpush1.msra.mxu0 %v92
    %140 = vmatprep.subr.mxu0 0.0
    %141 = vmatpush2.msra.mxu0 0.0
    %142 = vmatprep.subr.mxu0 0.0
    %143 = vmatpush2.msra.mxu0 0.0
    %144 = vmatprep.subr.mxu0 0.0
    %145 = vmatpush2.msra.mxu0 0.0
    %146 = vmatprep.subr.mxu0 0.0
    %147 = vmatpush2.msra.mxu0 0.0
    %148 = vmatprep.subr.mxu0 0.0
    %149 = vmatpush2.msra.mxu0 0.0
    %150 = vmatprep.subr.mxu0 0.0
    %151 = vmatpush2.msra.mxu0 0.0
    %152 = vmatprep.subr.mxu0 0.0
    %153 = vmatpush2.msra.mxu0 0.0
    %154 = vmatprep.subr.mxu0 0.0
    %155 = vmatpush2.msra.mxu0 0.0
    %156 = vmatprep.subr.mxu0 0.0
    %157 = vmatpush2.msra.mxu0 0.0
    %158 = vmatprep.subr.mxu0 0.0
    %159 = vmatpush2.msra.mxu0 0.0
    %160 = vmatprep.subr.mxu0 0.0
    %161 = vmatpush2.msra.mxu0 0.0
    %162 = vmatprep.subr.mxu0 0.0
    %163 = vmatpush2.msra.mxu0 0.0
    %164 = vmatprep.subr.mxu0 0.0
    %165 = vmatpush2.msra.mxu0 0.0
    %166 = vmatprep.subr.mxu0 0.0
    %167 = vmatpush2.msra.mxu0 0.0
    %168 = vmatprep.subr.mxu0 0.0
    %169 = vmatpush2.msra.mxu0 0.0
    %170 = vmatprep.subr.mxu0 0.0
    %171 = vmatpush2.msra.mxu0 0.0
    %172 = vmatprep.mubr.f32.mxu0 0.0
    %173 = vmatmul.mubr.f32.gmra.mxu0 %v76
    %v174 = vpop.f32.mrf.mxu0
    %v175 = vadd.f32 0.0, %v174
    %v176 = vpop.f32.mrf.mxu0
    %177 = vmatprep.mubr.f32.mxu0 0.0
    %178 = vmatmul.mubr.f32.gmra.mxu0 %v77
    %v179 = vpop.f32.mrf.mxu0
    %v180 = vadd.f32 0.0, %v179
    %v181 = vpop.f32.mrf.mxu0
    %182 = vmatprep.mubr.f32.mxu0 0.0
    %183 = vmatmul.mubr.f32.gmra.mxu0 %v78
    %v184 = vpop.f32.mrf.mxu0
    %v185 = vadd.f32 0.0, %v184
    %v186 = vpop.f32.mrf.mxu0
    %187 = vmatprep.mubr.f32.mxu0 0.0
    %188 = vmatmul.mubr.f32.gmra.mxu0 %v79
    %v189 = vpop.f32.mrf.mxu0
    %v190 = vadd.f32 0.0, %v189
    %v191 = vpop.f32.mrf.mxu0
    %192 = vmatprep.mubr.f32.mxu0 0.0
    %193 = vmatmul.mubr.f32.gmra.mxu0 %v80
    %v194 = vpop.f32.mrf.mxu0
    %v195 = vadd.f32 0.0, %v194
    %v196 = vpop.f32.mrf.mxu0
    %197 = vmatprep.mubr.f32.mxu0 0.0
    %198 = vmatmul.mubr.f32.gmra.mxu0 %v81
    %v199 = vpop.f32.mrf.mxu0
    %v200 = vadd.f32 0.0, %v199
    %v201 = vpop.f32.mrf.mxu0
    %202 = vmatprep.mubr.f32.mxu0 0.0
    %203 = vmatmul.mubr.f32.gmra.mxu0 %v82
    %v204 = vpop.f32.mrf.mxu0
    %v205 = vadd.f32 0.0, %v204
    %v206 = vpop.f32.mrf.mxu0
    %207 = vmatprep.mubr.f32.mxu0 0.0
    %208 = vmatmul.mubr.f32.gmra.mxu0 %v83
    %v209 = vpop.f32.mrf.mxu0
    %v210 = vadd.f32 0.0, %v209
    %v211 = vpop.f32.mrf.mxu0
    %212 = vmatprep.mubr.f32.mxu0 0.0
    %213 = vmatmul.mubr.f32.gmra.mxu0 %v84
    %v214 = vpop.f32.mrf.mxu0
    %v215 = vadd.f32 0.0, %v214
    %v216 = vpop.f32.mrf.mxu0
    %217 = vmatprep.mubr.f32.mxu0 0.0
    %218 = vmatmul.mubr.f32.gmra.mxu0 %v85
    %v219 = vpop.f32.mrf.mxu0
    %v220 = vadd.f32 0.0, %v219
    %v221 = vpop.f32.mrf.mxu0
    %222 = vmatprep.mubr.f32.mxu0 0.0
    %223 = vmatmul.mubr.f32.gmra.mxu0 %v86
    %v224 = vpop.f32.mrf.mxu0
    %v225 = vadd.f32 0.0, %v224
    %v226 = vpop.f32.mrf.mxu0
    %227 = vmatprep.mubr.f32.mxu0 0.0
    %228 = vmatmul.mubr.f32.gmra.mxu0 %v87
    %v229 = vpop.f32.mrf.mxu0
    %v230 = vadd.f32 0.0, %v229
    %v231 = vpop.f32.mrf.mxu0
    %232 = vmatprep.mubr.f32.mxu0 0.0
    %233 = vmatmul.mubr.f32.gmra.mxu0 %v88
    %v234 = vpop.f32.mrf.mxu0
    %v235 = vadd.f32 0.0, %v234
    %v236 = vpop.f32.mrf.mxu0
    %237 = vmatprep.mubr.f32.mxu0 0.0
    %238 = vmatmul.mubr.f32.gmra.mxu0 %v89
    %v239 = vpop.f32.mrf.mxu0
    %v240 = vadd.f32 0.0, %v239
    %v241 = vpop.f32.mrf.mxu0
    %242 = vmatprep.mubr.f32.mxu0 0.0
    %243 = vmatmul.mubr.f32.gmra.mxu0 %v90
    %v244 = vpop.f32.mrf.mxu0
    %v245 = vadd.f32 0.0, %v244
    %v246 = vpop.f32.mrf.mxu0
    %247 = vmatprep.mubr.f32.mxu0 0.0
    %248 = vmatmul.mubr.f32.gmra.mxu0 %v91
    %v249 = vpop.f32.mrf.mxu0
    %v250 = vadd.f32 0.0, %v249
    %v251 = vpop.f32.mrf.mxu0
    %252 = vdwg.mxu0
    %v253 = vld [vmem:[#allocation2] sm:$0xff]
    %v254 = vld [vmem:[#allocation2 + $0x8] sm:$0xff]
    %v255 = vld [vmem:[#allocation2 + $0x10] sm:$0xff]
    %v256 = vld [vmem:[#allocation2 + $0x18] sm:$0xff]
    %v257 = vld [vmem:[#allocation2 + $0x20] sm:$0xff]
    %v258 = vld [vmem:[#allocation2 + $0x28] sm:$0xff]
    %v259 = vld [vmem:[#allocation2 + $0x30] sm:$0xff]
    %v260 = vld [vmem:[#allocation2 + $0x38] sm:$0xff]
    %v261 = vld [vmem:[#allocation2 + $0x40] sm:$0xff]
    %v262 = vld [vmem:[#allocation2 + $0x48] sm:$0xff]
    %v263 = vld [vmem:[#allocation2 + $0x50] sm:$0xff]
    %v264 = vld [vmem:[#allocation2 + $0x58] sm:$0xff]
    %v265 = vld [vmem:[#allocation2 + $0x60] sm:$0xff]
    %v266 = vld [vmem:[#allocation2 + $0x68] sm:$0xff]
    %v267 = vld [vmem:[#allocation2 + $0x70] sm:$0xff]
    %v268 = vld [vmem:[#allocation2 + $0x78] sm:$0xff]
    %v269 = vld [vmem:[#allocation3] sm:$0xff]
    %v270 = vld [vmem:[#allocation3 + $0x8] sm:$0xff]
    %v271 = vld [vmem:[#allocation3 + $0x10] sm:$0xff]
    %v272 = vld [vmem:[#allocation3 + $0x18] sm:$0xff]
    %v273 = vld [vmem:[#allocation3 + $0x20] sm:$0xff]
    %v274 = vld [vmem:[#allocation3 + $0x28] sm:$0xff]
    %v275 = vld [vmem:[#allocation3 + $0x30] sm:$0xff]
    %v276 = vld [vmem:[#allocation3 + $0x38] sm:$0xff]
    %v277 = vld [vmem:[#allocation3 + $0x40] sm:$0xff]
    %v278 = vld [vmem:[#allocation3 + $0x48] sm:$0xff]
    %v279 = vld [vmem:[#allocation3 + $0x50] sm:$0xff]
    %v280 = vld [vmem:[#allocation3 + $0x58] sm:$0xff]
    %v281 = vld [vmem:[#allocation3 + $0x60] sm:$0xff]
    %v282 = vld [vmem:[#allocation3 + $0x68] sm:$0xff]
    %v283 = vld [vmem:[#allocation3 + $0x70] sm:$0xff]
    %v284 = vld [vmem:[#allocation3 + $0x78] sm:$0xff]
    %285 = vmatprep.subr.mxu0 0.0
    %286 = vmatpush1.msra.mxu0 %v250
    %287 = vmatprep.subr.mxu0 0.0
    %288 = vmatpush1.msra.mxu0 %v245
    %289 = vmatprep.subr.mxu0 0.0
    %290 = vmatpush1.msra.mxu0 %v240
    %291 = vmatprep.subr.mxu0 0.0
    %292 = vmatpush1.msra.mxu0 %v235
    %293 = vmatprep.subr.mxu0 0.0
    %294 = vmatpush1.msra.mxu0 %v230
    %295 = vmatprep.subr.mxu0 0.0
    %296 = vmatpush1.msra.mxu0 %v225
    %297 = vmatprep.subr.mxu0 0.0
    %298 = vmatpush1.msra.mxu0 %v220
    %299 = vmatprep.subr.mxu0 0.0
    %300 = vmatpush1.msra.mxu0 %v215
    %301 = vmatprep.subr.mxu0 0.0
    %302 = vmatpush1.msra.mxu0 %v210
    %303 = vmatprep.subr.mxu0 0.0
    %304 = vmatpush1.msra.mxu0 %v205
    %305 = vmatprep.subr.mxu0 0.0
    %306 = vmatpush1.msra.mxu0 %v200
    %307 = vmatprep.subr.mxu0 0.0
    %308 = vmatpush1.msra.mxu0 %v195
    %309 = vmatprep.subr.mxu0 0.0
    %310 = vmatpush1.msra.mxu0 %v190
    %311 = vmatprep.subr.mxu0 0.0
    %312 = vmatpush1.msra.mxu0 %v185
    %313 = vmatprep.subr.mxu0 0.0
    %314 = vmatpush1.msra.mxu0 %v180
    %315 = vmatprep.subr.mxu0 0.0
    %316 = vmatpush1.msra.mxu0 %v175
    %317 = vmatprep.subr.mxu0 0.0
    %318 = vmatpush2.msra.mxu0 0.0
    %319 = vmatprep.subr.mxu0 0.0
    %320 = vmatpush2.msra.mxu0 0.0
    %321 = vmatprep.subr.mxu0 0.0
    %322 = vmatpush2.msra.mxu0 0.0
    %323 = vmatprep.subr.mxu0 0.0
    %324 = vmatpush2.msra.mxu0 0.0
    %325 = vmatprep.subr.mxu0 0.0
    %326 = vmatpush2.msra.mxu0 0.0
    %327 = vmatprep.subr.mxu0 0.0
    %328 = vmatpush2.msra.mxu0 0.0
    %329 = vmatprep.subr.mxu0 0.0
    %330 = vmatpush2.msra.mxu0 0.0
    %331 = vmatprep.subr.mxu0 0.0
    %332 = vmatpush2.msra.mxu0 0.0
    %333 = vmatprep.subr.mxu0 0.0
    %334 = vmatpush2.msra.mxu0 0.0
    %335 = vmatprep.subr.mxu0 0.0
    %336 = vmatpush2.msra.mxu0 0.0
    %337 = vmatprep.subr.mxu0 0.0
    %338 = vmatpush2.msra.mxu0 0.0
    %339 = vmatprep.subr.mxu0 0.0
    %340 = vmatpush2.msra.mxu0 0.0
    %341 = vmatprep.subr.mxu0 0.0
    %342 = vmatpush2.msra.mxu0 0.0
    %343 = vmatprep.subr.mxu0 0.0
    %344 = vmatpush2.msra.mxu0 0.0
    %345 = vmatprep.subr.mxu0 0.0
    %346 = vmatpush2.msra.mxu0 0.0
    %347 = vmatprep.subr.mxu0 0.0
    %348 = vmatpush2.msra.mxu0 0.0
    %349 = vmatprep.mubr.f32.mxu0 0.0
    %350 = vmatmul.mubr.f32.gmra.mxu0 %v269
    %v351 = vpop.f32.mrf.mxu0
    %v352 = vadd.f32 0.0, %v351
    %v353 = vpop.f32.mrf.mxu0
    %354 = vmatprep.mubr.f32.mxu0 0.0
    %355 = vmatmul.mubr.f32.gmra.mxu0 %v270
    %v356 = vpop.f32.mrf.mxu0
    %v357 = vadd.f32 0.0, %v356
    %v358 = vpop.f32.mrf.mxu0
    %359 = vmatprep.mubr.f32.mxu0 0.0
    %360 = vmatmul.mubr.f32.gmra.mxu0 %v271
    %v361 = vpop.f32.mrf.mxu0
    %v362 = vadd.f32 0.0, %v361
    %v363 = vpop.f32.mrf.mxu0
    %364 = vmatprep.mubr.f32.mxu0 0.0
    %365 = vmatmul.mubr.f32.gmra.mxu0 %v272
    %v366 = vpop.f32.mrf.mxu0
    %v367 = vadd.f32 0.0, %v366
    %v368 = vpop.f32.mrf.mxu0
    %369 = vmatprep.mubr.f32.mxu0 0.0
    %370 = vmatmul.mubr.f32.gmra.mxu0 %v273
    %v371 = vpop.f32.mrf.mxu0
    %v372 = vadd.f32 0.0, %v371
    %v373 = vpop.f32.mrf.mxu0
    %374 = vmatprep.mubr.f32.mxu0 0.0
    %375 = vmatmul.mubr.f32.gmra.mxu0 %v274
    %v376 = vpop.f32.mrf.mxu0
    %v377 = vadd.f32 0.0, %v376
    %v378 = vpop.f32.mrf.mxu0
    %379 = vmatprep.mubr.f32.mxu0 0.0
    %380 = vmatmul.mubr.f32.gmra.mxu0 %v275
    %v381 = vpop.f32.mrf.mxu0
    %v382 = vadd.f32 0.0, %v381
    %v383 = vpop.f32.mrf.mxu0
    %384 = vmatprep.mubr.f32.mxu0 0.0
    %385 = vmatmul.mubr.f32.gmra.mxu0 %v276
    %v386 = vpop.f32.mrf.mxu0
    %v387 = vadd.f32 0.0, %v386
    %v388 = vpop.f32.mrf.mxu0
    %389 = vmatprep.mubr.f32.mxu0 0.0
    %390 = vmatmul.mubr.f32.gmra.mxu0 %v277
    %v391 = vpop.f32.mrf.mxu0
    %v392 = vadd.f32 0.0, %v391
    %v393 = vpop.f32.mrf.mxu0
    %394 = vmatprep.mubr.f32.mxu0 0.0
    %395 = vmatmul.mubr.f32.gmra.mxu0 %v278
    %v396 = vpop.f32.mrf.mxu0
    %v397 = vadd.f32 0.0, %v396
    %v398 = vpop.f32.mrf.mxu0
    %399 = vmatprep.mubr.f32.mxu0 0.0
    %400 = vmatmul.mubr.f32.gmra.mxu0 %v279
    %v401 = vpop.f32.mrf.mxu0
    %v402 = vadd.f32 0.0, %v401
    %v403 = vpop.f32.mrf.mxu0
    %404 = vmatprep.mubr.f32.mxu0 0.0
    %405 = vmatmul.mubr.f32.gmra.mxu0 %v280
    %v406 = vpop.f32.mrf.mxu0
    %v407 = vadd.f32 0.0, %v406
    %v408 = vpop.f32.mrf.mxu0
    %409 = vmatprep.mubr.f32.mxu0 0.0
    %410 = vmatmul.mubr.f32.gmra.mxu0 %v281
    %v411 = vpop.f32.mrf.mxu0
    %v412 = vadd.f32 0.0, %v411
    %v413 = vpop.f32.mrf.mxu0
    %414 = vmatprep.mubr.f32.mxu0 0.0
    %415 = vmatmul.mubr.f32.gmra.mxu0 %v282
    %v416 = vpop.f32.mrf.mxu0
    %v417 = vadd.f32 0.0, %v416
    %v418 = vpop.f32.mrf.mxu0
    %419 = vmatprep.mubr.f32.mxu0 0.0
    %420 = vmatmul.mubr.f32.gmra.mxu0 %v283
    %v421 = vpop.f32.mrf.mxu0
    %v422 = vadd.f32 0.0, %v421
    %v423 = vpop.f32.mrf.mxu0
    %424 = vmatprep.mubr.f32.mxu0 0.0
    %425 = vmatmul.mubr.f32.gmra.mxu0 %v284
    %v426 = vpop.f32.mrf.mxu0
    %v427 = vadd.f32 0.0, %v426
    %v428 = vpop.f32.mrf.mxu0
    %429 = vdwg.mxu0
    %v430 = vadd.f32 %v253, %v352
    %v431 = vadd.f32 %v254, %v357
    %v432 = vadd.f32 %v255, %v362
    %v433 = vadd.f32 %v256, %v367
    %v434 = vadd.f32 %v257, %v372
    %v435 = vadd.f32 %v258, %v377
    %v436 = vadd.f32 %v259, %v382
    %v437 = vadd.f32 %v260, %v387
    %v438 = vadd.f32 %v261, %v392
    %v439 = vadd.f32 %v262, %v397
    %v440 = vadd.f32 %v263, %v402
    %v441 = vadd.f32 %v264, %v407
    %v442 = vadd.f32 %v265, %v412
    %v443 = vadd.f32 %v266, %v417
    %v444 = vadd.f32 %v267, %v422
    %v445 = vadd.f32 %v268, %v427
    %446 = vst [vmem:[#allocation2] sm:$0xff] %v430
    %447 = vst [vmem:[#allocation2 + $0x8] sm:$0xff] %v431
    %448 = vst [vmem:[#allocation2 + $0x10] sm:$0xff] %v432
    %449 = vst [vmem:[#allocation2 + $0x18] sm:$0xff] %v433
    %450 = vst [vmem:[#allocation2 + $0x20] sm:$0xff] %v434
    %451 = vst [vmem:[#allocation2 + $0x28] sm:$0xff] %v435
    %452 = vst [vmem:[#allocation2 + $0x30] sm:$0xff] %v436
    %453 = vst [vmem:[#allocation2 + $0x38] sm:$0xff] %v437
    %454 = vst [vmem:[#allocation2 + $0x40] sm:$0xff] %v438
    %455 = vst [vmem:[#allocation2 + $0x48] sm:$0xff] %v439
    %456 = vst [vmem:[#allocation2 + $0x50] sm:$0xff] %v440
    %457 = vst [vmem:[#allocation2 + $0x58] sm:$0xff] %v441
    %458 = vst [vmem:[#allocation2 + $0x60] sm:$0xff] %v442
    %459 = vst [vmem:[#allocation2 + $0x68] sm:$0xff] %v443
    %460 = vst [vmem:[#allocation2 + $0x70] sm:$0xff] %v444
    %461 = vst [vmem:[#allocation2 + $0x78] sm:$0xff] %v445
    // Predicated region
    $region30: #{tpu_custom_call.1} parent=1 // pred_check
      %p462 = pneg %p56
    $region31: #{tpu_custom_call.1} parent=1 // pred_check_branch
      %464 = sbr.rel (%p462) target = $region33
    $region32: #{tpu_custom_call.1} parent=1 // pred_region
      %v465 = vld [vmem:[#allocation2] sm:$0xff]
      %v466 = vld [vmem:[#allocation2 + $0x8] sm:$0xff]
      %v467 = vld [vmem:[#allocation2 + $0x10] sm:$0xff]
      %v468 = vld [vmem:[#allocation2 + $0x18] sm:$0xff]
      %v469 = vld [vmem:[#allocation2 + $0x20] sm:$0xff]
      %v470 = vld [vmem:[#allocation2 + $0x28] sm:$0xff]
      %v471 = vld [vmem:[#allocation2 + $0x30] sm:$0xff]
      %v472 = vld [vmem:[#allocation2 + $0x38] sm:$0xff]
      %v473 = vld [vmem:[#allocation2 + $0x40] sm:$0xff]
      %v474 = vld [vmem:[#allocation2 + $0x48] sm:$0xff]
      %v475 = vld [vmem:[#allocation2 + $0x50] sm:$0xff]
      %v476 = vld [vmem:[#allocation2 + $0x58] sm:$0xff]
      %v477 = vld [vmem:[#allocation2 + $0x60] sm:$0xff]
      %v478 = vld [vmem:[#allocation2 + $0x68] sm:$0xff]
      %v479 = vld [vmem:[#allocation2 + $0x70] sm:$0xff]
      %v480 = vld [vmem:[#allocation2 + $0x78] sm:$0xff]
      %v481 = vmax.f32 %v465, 0.0
      %v482 = vmax.f32 %v466, 0.0
      %v483 = vmax.f32 %v467, 0.0
      %v484 = vmax.f32 %v468, 0.0
      %v485 = vmax.f32 %v469, 0.0
      %v486 = vmax.f32 %v470, 0.0
      %v487 = vmax.f32 %v471, 0.0
      %v488 = vmax.f32 %v472, 0.0
      %v489 = vmax.f32 %v473, 0.0
      %v490 = vmax.f32 %v474, 0.0
      %v491 = vmax.f32 %v475, 0.0
      %v492 = vmax.f32 %v476, 0.0
      %v493 = vmax.f32 %v477, 0.0
      %v494 = vmax.f32 %v478, 0.0
      %v495 = vmax.f32 %v479, 0.0
      %v496 = vmax.f32 %v480, 0.0
      %497 = vst [vmem:[#allocation9] sm:$0xff] %v481
      %498 = vst [vmem:[#allocation9 + $0x8] sm:$0xff] %v482
      %499 = vst [vmem:[#allocation9 + $0x10] sm:$0xff] %v483
      %500 = vst [vmem:[#allocation9 + $0x18] sm:$0xff] %v484
      %501 = vst [vmem:[#allocation9 + $0x20] sm:$0xff] %v485
      %502 = vst [vmem:[#allocation9 + $0x28] sm:$0xff] %v486
      %503 = vst [vmem:[#allocation9 + $0x30] sm:$0xff] %v487
      %504 = vst [vmem:[#allocation9 + $0x38] sm:$0xff] %v488
      %505 = vst [vmem:[#allocation9 + $0x40] sm:$0xff] %v489
      %506 = vst [vmem:[#allocation9 + $0x48] sm:$0xff] %v490
      %507 = vst [vmem:[#allocation9 + $0x50] sm:$0xff] %v491
      %508 = vst [vmem:[#allocation9 + $0x58] sm:$0xff] %v492
      %509 = vst [vmem:[#allocation9 + $0x60] sm:$0xff] %v493
      %510 = vst [vmem:[#allocation9 + $0x68] sm:$0xff] %v494
      %511 = vst [vmem:[#allocation9 + $0x70] sm:$0xff] %v495
      %512 = vst [vmem:[#allocation9 + $0x78] sm:$0xff] %v496
    $region33: #{tpu_custom_call.1} parent=1 // pred_fallthru
      _
    // Predicated region
    $region34: #{tpu_custom_call.1} parent=1 // pred_check
      _
    $region35: #{tpu_custom_call.1} parent=1 // pred_check_branch
      %514 = sbr.rel (0) target = $region37
    $region36: #{tpu_custom_call.1} parent=1 // pred_region
      %s516 = ssub.s32 2048, 2048
      %517 = vsyncadd [#allocation5], %s516
      %s518 = sshll.u32 [#allocation9], 4
      %s519 = int_to_ptr.vmem [resolvable:$true] %s518
      %524 = dma.vmem_to_hbm [thread:$0]  %s519, 2048, %s3, [#allocation5], 128, 128, 8
    $region37: #{tpu_custom_call.1} parent=1 // pred_fallthru
      _
    // Predicated region
    $region38: #{tpu_custom_call.1} parent=1 // pred_check
      _
    $region39: #{tpu_custom_call.1} parent=1 // pred_check_branch
      %526 = sbr.rel (0) target = $region41
    $region40: #{tpu_custom_call.1} parent=1 // pred_region
      %527 = dma.done [#allocation5], 2048
    $region41: #{tpu_custom_call.1} parent=1 // pred_fallthru
      _
    %528 = vsyncpa [#allocation4], 1
    %529 = vsyncpa [#allocation7], 1
    %530 = vsyncpa [#allocation5], 1

</llo_original>
